<compile_context>
chip_gen: v7x
topology: tpu7x:2x2x1
jax: 0.10.0
libtpu: 0.0.40
codegen_flags: <defaults>
</compile_context>

<pallas_src>
import math

import jax
import jax.numpy as jnp
from jax import lax
from jax.experimental import pallas as pl
from jax.experimental.pallas import tpu as pltpu

_TARGET_TILE_BYTES = 4 * 1024 * 1024   # ~4 MiB of input rows per grid step
_MIN_GRID_STEPS = 8                    # keep pipeline / both v7x cores busy


def _round_up(a, b):
    return ((a + b - 1) // b) * b


def _make_kernel(H, th):
    """Kernel closure over static image height H and row-tile size th."""
    nstrips = th // 8

    def kernel(xm_ref, xa_ref, xb_ref, o_ref):
        # xm_ref : (th, W) input rows [i*th, i*th+th)
        # xa_ref : (8,  W) input rows [i*th-8, i*th)       (clamped at i == 0)
        # xb_ref : (8,  W) input rows [(i+1)*th, +8)       (clamped at last i)
        # o_ref  : (th, W) output rows [i*th, i*th+th)
        w = o_ref.shape[1]
        g0 = pl.program_id(1) * th          # global row index of tile row 0

        def strip(s):
            r0 = 8 * s
            mid = xm_ref[pl.ds(r0, 8), :].astype(jnp.float32)       # rows g..g+7

            # Single row just above / just below this 8-row strip.
            up_prev = jnp.where(
                s > 0,
                xm_ref[pl.ds(jnp.maximum(r0 - 1, 0), 1), :],
                xa_ref[7:8, :])
            dn_next = jnp.where(
                s < nstrips - 1,
                xm_ref[pl.ds(jnp.minimum(r0 + 8, th - 1), 1), :],
                xb_ref[0:1, :])

            up = jnp.concatenate([up_prev.astype(jnp.float32), mid[:7, :]], axis=0)
            dn = jnp.concatenate([mid[1:, :], dn_next.astype(jnp.float32)], axis=0)

            # Conv zero-padding at the image top/bottom (also kills any
            # garbage read from clamped halo blocks / ragged last tile).
            grow = g0 + r0 + lax.broadcasted_iota(jnp.int32, (8, 1), 0)
            up = jnp.where(grow == 0, 0.0, up)
            dn = jnp.where(grow >= H - 1, 0.0, dn)

            # Separable Sobel, vertical pass (pure VPU on vregs).
            v = up + 2.0 * mid + dn          # column smooth -> feeds dx
            d = dn - up                      # column diff   -> feeds dy

            # Horizontal pass: zero-pad one column each side, lane-offset slices.
            z = jnp.zeros((8, 1), jnp.float32)
            ve = jnp.concatenate([z, v, z], axis=1)          # (8, w+2)
            de = jnp.concatenate([z, d, z], axis=1)
            dx = ve[:, 2:] - ve[:, :w]
            dy = de[:, :w] + 2.0 * d + de[:, 2:]

            aspect = (180.0 / math.pi) * jnp.arctan2(-dy, dx)
            aspect = jnp.where(aspect > 90.0, 450.0 - aspect, 90.0 - aspect)
            o_ref[pl.ds(r0, 8), :] = aspect.astype(o_ref.dtype)

        if nstrips <= 8:
            for s in range(nstrips):          # fully unrolled at trace time
                strip(s)
        else:
            lax.fori_loop(0, nstrips, lambda s, c: (strip(s), c)[1], 0)

    return kernel


def aspect_pallas(x, *, row_tile=None):
    """x: (N, 1, H, W) NCHW like the PyTorch module. Returns (N, 1, H, W)."""
    N, C, H, W = x.shape
    assert C == 1, "Aspect_torch is a single-channel stencil"
    itemsize = jnp.dtype(x.dtype).itemsize

    # Row tile: ~_TARGET_TILE_BYTES of input per step, multiple of 8, and
    # capped so the grid has at least ~_MIN_GRID_STEPS steps when H allows.
    if row_tile is None:
        th = _TARGET_TILE_BYTES // max(W * itemsize, 1)
        per_n = max(1, _MIN_GRID_STEPS // N)
        th = min(th, _round_up(-(-H // per_n), 8))
    else:
        th = int(row_tile)
    th = max(8, (th // 8) * 8)
    th = min(th, _round_up(H, 8))

    th8 = th // 8
    T = -(-H // th)                   # number of row tiles
    nblk8 = -(-H // 8)                # number of 8-row halo blocks in H

    band = pl.BlockSpec((None, None, th, W), lambda n, i: (n, 0, i, 0))
    above = pl.BlockSpec(
        (None, None, 8, W),
        lambda n, i: (n, 0, jnp.maximum(i * th8 - 1, 0), 0))
    below = pl.BlockSpec(
        (None, None, 8, W),
        lambda n, i: (n, 0, jnp.minimum((i + 1) * th8, nblk8 - 1), 0))
    out_spec = pl.BlockSpec((None, None, th, W), lambda n, i: (n, 0, i, 0))

    # VMEM need: double-buffered in band + 2 halos + out band, plus headroom.
    vmem_need = 2 * (th * W + 16 * W) * itemsize + 2 * th * W * itemsize + (4 << 20)
    vmem_limit = int(min(max(vmem_need, 16 << 20), 32 << 20))

    cost = pl.CostEstimate(
        flops=16 * N * H * W,
        transcendentals=N * H * W,
        bytes_accessed=2 * N * H * W * itemsize)

    return pl.pallas_call(
        _make_kernel(H, th),
        out_shape=jax.ShapeDtypeStruct((N, 1, H, W), x.dtype),
        grid_spec=pltpu.PrefetchScalarGridSpec(
            num_scalar_prefetch=0,
            grid=(N, T),
            in_specs=[band, above, below],
            out_specs=out_spec),
        compiler_params=pltpu.CompilerParams(
            dimension_semantics=("parallel", "parallel"),
            vmem_limit_bytes=vmem_limit),
        cost_estimate=cost,
    )(x, x, x)


def aspect_reference(x):
    """Plain-JAX reference reproducing the PyTorch forward exactly."""
    w1 = jnp.array([[-1.0, 0.0, 1.0],
                    [-2.0, 0.0, 2.0],
                    [-1.0, 0.0, 1.0]], dtype=jnp.float32)
    w2 = jnp.array([[-1.0, -2.0, -1.0],
                    [0.0,  0.0,  0.0],
                    [1.0,  2.0,  1.0]], dtype=jnp.float32)
    xp = jnp.pad(x[:, 0, :, :].astype(jnp.float32), ((0, 0), (1, 1), (1, 1)))
    N, Hp, Wp = xp.shape
    H, W = Hp - 2, Wp - 2
    dx = jnp.zeros((N, H, W), jnp.float32)
    dy = jnp.zeros((N, H, W), jnp.float32)
    for a in range(3):
        for b in range(3):
            patch = xp[:, a:a + H, b:b + W]
            dx = dx + w1[a, b] * patch
            dy = dy + w2[a, b] * patch
    aspect = 180.0 / math.pi * jnp.arctan2(-dy, dx)
    aspect = jnp.where(aspect > 90.0, 360.0 - aspect + 90.0, 90.0 - aspect)
    return aspect[:, None, :, :].astype(x.dtype)


def _check(out, ref, tol=2e-3):
    # The remap is discontinuous at aspect == 90 deg (0 vs 360 = same
    # direction); compare modulo 360 so last-ulp atan2 differences near the
    # cut cannot produce spurious failures.
    diff = jnp.abs(out.astype(jnp.float32) - ref.astype(jnp.float32))
    diff = jnp.minimum(diff, jnp.abs(diff - 360.0))
    return float(jnp.max(diff)) < tol


if __name__ == "__main__":
    key = jax.random.PRNGKey(0)
    k1, k2 = jax.random.split(key)

    fn = jax.jit(aspect_pallas, static_argnames=("row_tile",))

    # Primary small test, NCHW like the module expects (multi-tile: T=2).
    x = jax.random.normal(k1, (2, 1, 16, 16), dtype=jnp.float32)
    out = jax.block_until_ready(fn(x))
    assert out.shape == x.shape
    assert _check(out, aspect_reference(x)), "mismatch vs reference (test 1)"

    # Second test: 5 row tiles, W not a multiple of 128, exercises halo
    # clamping at the first/last tiles.
    x2 = jax.random.normal(k2, (1, 1, 40, 72), dtype=jnp.float32)
    out2 = jax.block_until_ready(fn(x2, row_tile=8))
    assert out2.shape == x2.shape
    assert _check(out2, aspect_reference(x2)), "mismatch vs reference (test 2)"

    print("KERNEL_OK")
</pallas_src>

<mosaic_0001>
module attributes {stable_mosaic.version = 11 : i64} {
  func.func @kernel(%arg0: i32, %arg1: i32, %arg2: memref<1x1x8x16xf32, #tpu.memory_space<vmem>>, %arg3: memref<1x1x8x16xf32, #tpu.memory_space<vmem>>, %arg4: memref<1x1x8x16xf32, #tpu.memory_space<vmem>>, %arg5: memref<1x1x8x16xf32, #tpu.memory_space<vmem>>) attributes {dimension_semantics = [#tpu.dimension_semantics<parallel>, #tpu.dimension_semantics<parallel>], iteration_bounds = array<i64: 2, 2>, scalar_prefetch = 0 : i64, scratch_operands = 0 : i64, tpu.core_type = #tpu.core_type<tc>, window_params = [{transform_indices = @transform_0, window_bounds = array<i64: 1, 1, 8, 16>}, {transform_indices = @transform_1, window_bounds = array<i64: 1, 1, 8, 16>}, {transform_indices = @transform_2, window_bounds = array<i64: 1, 1, 8, 16>}, {transform_indices = @transform_3, window_bounds = array<i64: 1, 1, 8, 16>}]} {
    %c8_i32 = arith.constant 8 : i32
    %0 = arith.muli %arg1, %c8_i32 : i32
    %c0 = arith.constant 0 : index
    %c0_0 = arith.constant 0 : index
    %c0_1 = arith.constant 0 : index
    %c0_2 = arith.constant 0 : index
    %1 = vector.load %arg2[%c0, %c0_0, %c0_1, %c0_2] : memref<1x1x8x16xf32, #tpu.memory_space<vmem>>, vector<1x1x8x16xf32>
    %2 = vector.shape_cast %1 : vector<1x1x8x16xf32> to vector<8x16xf32>
    %c-1_i32 = arith.constant -1 : i32
    %c0_i32 = arith.constant 0 : i32
    %3 = arith.maxsi %c-1_i32, %c0_i32 : i32
    %c0_3 = arith.constant 0 : index
    %c0_4 = arith.constant 0 : index
    %4 = arith.index_cast %3 : i32 to index
    %c0_5 = arith.constant 0 : index
    %5 = vector.load %arg2[%c0_3, %c0_4, %4, %c0_5] : memref<1x1x8x16xf32, #tpu.memory_space<vmem>>, vector<1x1x1x16xf32>
    %6 = vector.shape_cast %5 : vector<1x1x1x16xf32> to vector<1x16xf32>
    %c0_6 = arith.constant 0 : index
    %c0_7 = arith.constant 0 : index
    %c7 = arith.constant 7 : index
    %c0_8 = arith.constant 0 : index
    %7 = vector.load %arg3[%c0_6, %c0_7, %c7, %c0_8] : memref<1x1x8x16xf32, #tpu.memory_space<vmem>>, vector<1x1x1x16xf32>
    %8 = vector.shape_cast %7 : vector<1x1x1x16xf32> to vector<1x16xf32>
    %false = arith.constant false
    %9 = arith.select %false, %6, %8 : vector<1x16xf32>
    %c8_i32_9 = arith.constant 8 : i32
    %c7_i32 = arith.constant 7 : i32
    %10 = arith.minsi %c8_i32_9, %c7_i32 : i32
    %c0_10 = arith.constant 0 : index
    %c0_11 = arith.constant 0 : index
    %11 = arith.index_cast %10 : i32 to index
    %c0_12 = arith.constant 0 : index
    %12 = vector.load %arg2[%c0_10, %c0_11, %11, %c0_12] : memref<1x1x8x16xf32, #tpu.memory_space<vmem>>, vector<1x1x1x16xf32>
    %13 = vector.shape_cast %12 : vector<1x1x1x16xf32> to vector<1x16xf32>
    %c0_13 = arith.constant 0 : index
    %c0_14 = arith.constant 0 : index
    %c0_15 = arith.constant 0 : index
    %c0_16 = arith.constant 0 : index
    %14 = vector.load %arg4[%c0_13, %c0_14, %c0_15, %c0_16] : memref<1x1x8x16xf32, #tpu.memory_space<vmem>>, vector<1x1x1x16xf32>
    %15 = vector.shape_cast %14 : vector<1x1x1x16xf32> to vector<1x16xf32>
    %false_17 = arith.constant false
    %16 = arith.select %false_17, %13, %15 : vector<1x16xf32>
    %17 = vector.extract_strided_slice %2 {offsets = [0, 0], sizes = [7, 16], strides = [1, 1]} : vector<8x16xf32> to vector<7x16xf32>
    %18 = tpu.concatenate %9, %17 in 0 : vector<1x16xf32>, vector<7x16xf32> -> vector<8x16xf32>
    %19 = vector.extract_strided_slice %2 {offsets = [1, 0], sizes = [7, 16], strides = [1, 1]} : vector<8x16xf32> to vector<7x16xf32>
    %20 = tpu.concatenate %19, %16 in 0 : vector<7x16xf32>, vector<1x16xf32> -> vector<8x16xf32>
    %c0_i32_18 = arith.constant 0 : i32
    %21 = arith.addi %0, %c0_i32_18 : i32
    %22 = tpu.iota {dimensions = array<i32: 0>} : vector<8x1xi32>
    %23 = vector.broadcast %21 : i32 to vector<8x1xi32>
    %24 = arith.addi %23, %22 : vector<8x1xi32>
    %c0_i32_19 = arith.constant 0 : i32
    %25 = vector.broadcast %c0_i32_19 : i32 to vector<8x1xi32>
    %26 = arith.cmpi eq, %24, %25 : vector<8x1xi32>
    %cst = arith.constant 0.000000e+00 : f32
    %27 = vector.shape_cast %26 : vector<8x1xi1> to vector<8x1xi1>
    %28 = vector.broadcast %27 : vector<8x1xi1> to vector<8x16xi1>
    %29 = vector.broadcast %cst : f32 to vector<8x16xf32>
    %30 = arith.select %28, %29, %18 : vector<8x16xi1>, vector<8x16xf32>
    %c15_i32 = arith.constant 15 : i32
    %31 = vector.broadcast %c15_i32 : i32 to vector<8x1xi32>
    %32 = arith.cmpi sge, %24, %31 : vector<8x1xi32>
    %cst_20 = arith.constant 0.000000e+00 : f32
    %33 = vector.shape_cast %32 : vector<8x1xi1> to vector<8x1xi1>
    %34 = vector.broadcast %33 : vector<8x1xi1> to vector<8x16xi1>
    %35 = vector.broadcast %cst_20 : f32 to vector<8x16xf32>
    %36 = arith.select %34, %35, %20 : vector<8x16xi1>, vector<8x16xf32>
    %cst_21 = arith.constant 2.000000e+00 : f32
    %37 = vector.broadcast %cst_21 : f32 to vector<8x16xf32>
    %38 = arith.mulf %37, %2 : vector<8x16xf32>
    %39 = arith.addf %30, %38 : vector<8x16xf32>
    %40 = arith.addf %39, %36 : vector<8x16xf32>
    %41 = arith.subf %36, %30 : vector<8x16xf32>
    %cst_22 = arith.constant 0.000000e+00 : f32
    %42 = vector.broadcast %cst_22 : f32 to vector<8x1xf32>
    %43 = tpu.concatenate %42, %40, %42 in 1 : vector<8x1xf32>, vector<8x16xf32>, vector<8x1xf32> -> vector<8x18xf32>
    %44 = tpu.concatenate %42, %41, %42 in 1 : vector<8x1xf32>, vector<8x16xf32>, vector<8x1xf32> -> vector<8x18xf32>
    %45 = vector.extract_strided_slice %43 {offsets = [0, 2], sizes = [8, 16], strides = [1, 1]} : vector<8x18xf32> to vector<8x16xf32>
    %46 = vector.extract_strided_slice %43 {offsets = [0, 0], sizes = [8, 16], strides = [1, 1]} : vector<8x18xf32> to vector<8x16xf32>
    %47 = arith.subf %45, %46 : vector<8x16xf32>
    %48 = vector.extract_strided_slice %44 {offsets = [0, 0], sizes = [8, 16], strides = [1, 1]} : vector<8x18xf32> to vector<8x16xf32>
    %cst_23 = arith.constant 2.000000e+00 : f32
    %49 = vector.broadcast %cst_23 : f32 to vector<8x16xf32>
    %50 = arith.mulf %49, %41 : vector<8x16xf32>
    %51 = arith.addf %48, %50 : vector<8x16xf32>
    %52 = vector.extract_strided_slice %44 {offsets = [0, 2], sizes = [8, 16], strides = [1, 1]} : vector<8x18xf32> to vector<8x16xf32>
    %53 = arith.addf %51, %52 : vector<8x16xf32>
    %cst_24 = arith.constant 0.000000e+00 : f32
    %54 = vector.broadcast %cst_24 : f32 to vector<8x16xf32>
    %55 = arith.subf %54, %53 : vector<8x16xf32>
    %56 = math.atan2 %55, %47 : vector<8x16xf32>
    %cst_25 = arith.constant 57.2957802 : f32
    %57 = vector.broadcast %cst_25 : f32 to vector<8x16xf32>
    %58 = arith.mulf %57, %56 : vector<8x16xf32>
    %cst_26 = arith.constant 9.000000e+01 : f32
    %59 = vector.broadcast %cst_26 : f32 to vector<8x16xf32>
    %60 = arith.cmpf ogt, %58, %59 : vector<8x16xf32>
    %cst_27 = arith.constant 4.500000e+02 : f32
    %61 = vector.broadcast %cst_27 : f32 to vector<8x16xf32>
    %62 = arith.subf %61, %58 : vector<8x16xf32>
    %cst_28 = arith.constant 9.000000e+01 : f32
    %63 = vector.broadcast %cst_28 : f32 to vector<8x16xf32>
    %64 = arith.subf %63, %58 : vector<8x16xf32>
    %65 = arith.select %60, %62, %64 : vector<8x16xi1>, vector<8x16xf32>
    %c0_29 = arith.constant 0 : index
    %c0_30 = arith.constant 0 : index
    %c0_31 = arith.constant 0 : index
    %c0_32 = arith.constant 0 : index
    %66 = vector.load %arg5[%c0_29, %c0_30, %c0_31, %c0_32] : memref<1x1x8x16xf32, #tpu.memory_space<vmem>>, vector<1x1x8x16xf32>
    %67 = vector.shape_cast %66 : vector<1x1x8x16xf32> to vector<8x16xf32>
    %68 = vector.shape_cast %65 : vector<8x16xf32> to vector<1x1x8x16xf32>
    tpu.vector_store %arg5[%c0_29, %c0_30, %c0_31, %c0_32], %68 {strides = array<i32>} : memref<1x1x8x16xf32, #tpu.memory_space<vmem>>, vector<1x1x8x16xf32>,
    return
  }
  func.func @transform_0(%arg0: i32, %arg1: i32) -> (i32, i32, i32, i32) {
    %c0_i32 = arith.constant 0 : i32
    %c0_i32_0 = arith.constant 0 : i32
    %c0_i32_1 = arith.constant 0 : i32
    return %arg0, %c0_i32, %arg1, %c0_i32_0 : i32, i32, i32, i32
  }
  func.func @transform_1(%arg0: i32, %arg1: i32) -> (i32, i32, i32, i32) {
    %c1_i32 = arith.constant 1 : i32
    %0 = arith.muli %arg1, %c1_i32 : i32
    %c1_i32_0 = arith.constant 1 : i32
    %1 = arith.subi %0, %c1_i32_0 : i32
    %c0_i32 = arith.constant 0 : i32
    %2 = arith.maxsi %1, %c0_i32 : i32
    %c0_i32_1 = arith.constant 0 : i32
    %c0_i32_2 = arith.constant 0 : i32
    %c0_i32_3 = arith.constant 0 : i32
    return %arg0, %c0_i32_1, %2, %c0_i32_2 : i32, i32, i32, i32
  }
  func.func @transform_2(%arg0: i32, %arg1: i32) -> (i32, i32, i32, i32) {
    %c1_i32 = arith.constant 1 : i32
    %0 = arith.addi %arg1, %c1_i32 : i32
    %c1_i32_0 = arith.constant 1 : i32
    %1 = arith.muli %0, %c1_i32_0 : i32
    %c1_i32_1 = arith.constant 1 : i32
    %2 = arith.minsi %1, %c1_i32_1 : i32
    %c0_i32 = arith.constant 0 : i32
    %c0_i32_2 = arith.constant 0 : i32
    %c0_i32_3 = arith.constant 0 : i32
    return %arg0, %c0_i32, %2, %c0_i32_2 : i32, i32, i32, i32
  }
  func.func @transform_3(%arg0: i32, %arg1: i32) -> (i32, i32, i32, i32) {
    %c0_i32 = arith.constant 0 : i32
    %c0_i32_0 = arith.constant 0 : i32
    %c0_i32_1 = arith.constant 0 : i32
    return %arg0, %c0_i32, %arg1, %c0_i32_0 : i32, i32, i32, i32
  }
}

</mosaic_0001>

<llo_original>
// kernel: aspect_pallas.1
$region0: #{aspect_pallas.1}
  #allocation0 [shape = 'u32[]', space=smem, size = 0x4, offset = 0x4, fixed_abs, tag = 'smem constant byte address 0x4 - core index']
  #allocation1 [shape = 'u32[144,128]{1,0:T(1,128)}', space=vmem, size = 0x12000, scoped, tag = 'internal scratch']
  %s0 = inlined_call_operand.hbm [shape: f32[2,1,16,16], index: 0, kind: input, shape index: {}, may-alias: {0,1,2}]
  %s1 = inlined_call_operand.hbm [shape: f32[2,1,16,16], index: 1, kind: input, shape index: {}, may-alias: {0,1,2}]
  %s2 = inlined_call_operand.hbm [shape: f32[2,1,16,16], index: 2, kind: input, shape index: {}, may-alias: {0,1,2}]
  %s3 = inlined_call_operand.hbm [shape: f32[2,1,16,16], index: 3, kind: output, shape index: {}]
  %s4 = sld [smem:[#allocation0]]
  $region57: #{aspect_pallas.1} parent=0
    _
  %s6 = ssub.s32 1, %s4
  %s7 = scalar_select 0, %s6, %s4
  $region1: #{aspect_pallas.1} parent=0
    #allocation2 [shape = 'u8[8192]{0}', space=vmem, size = 0x2000, scoped, tag = 'input window, operand 0']
    #allocation3 [shape = 's32[2]{0}', space=sflag, size = 0x8, scoped, tag = 'scoped memory for aspect_pallas.1']
    #allocation4 [shape = 's32[2]{0}', space=sflag, size = 0x8, scoped, tag = 'scoped memory for aspect_pallas.1']
    #allocation5 [shape = 'u8[8192]{0}', space=vmem, size = 0x2000, scoped, tag = 'input window, operand 1']
    #allocation6 [shape = 's32[2]{0}', space=sflag, size = 0x8, scoped, tag = 'scoped memory for aspect_pallas.1']
    #allocation7 [shape = 'u8[8192]{0}', space=vmem, size = 0x2000, scoped, tag = 'input window, operand 2']
    #allocation8 [shape = 'u8[8192]{0}', space=vmem, size = 0x2000, scoped, tag = 'output window, operand 0']
    %8 = vsyncpa [#allocation3], 0
    %s9 = scalar_lea.sflag [#allocation3], 1
    %10 = vsyncpa %s9, 0
    %11 = vsyncpa [#allocation6], 0
    %s12 = scalar_lea.sflag [#allocation6], 1
    %13 = vsyncpa %s12, 0
    %14 = vsyncpa [#allocation4], 0
    %s15 = scalar_lea.sflag [#allocation4], 1
    %16 = vsyncpa %s15, 0
    loop: start=0, step=1, limit=6
    $region2: #{aspect_pallas.1} parent=1 // loop_pre_header
      _
    $region3: #{aspect_pallas.1} parent=1 // loop_header
      %s18 = sphi 0, %s22
      %p19 = scmp.ge.s32.totalorder %s18, 6
      %s25 = sphi 0, %s37
      %s26 = sphi 0, %s33
      %s27 = sphi 0, %s25
      %s28 = sphi 0, %s26
      %s29 = sphi 0, %s27
      %s30 = sphi 0, %s28
      %s42 = sphi 0, %s44
      %s45 = sphi 0, %s42
      %s46 = sphi 0, %s45
      %s62 = sphi 0, %s46
      %s76 = sphi 0, %s78
      %s79 = sphi 0, %s76
      %s80 = sphi 0, %s79
      %s96 = sphi 0, %s80
      %s110 = sphi 0, %s112
      %s113 = sphi 0, %s110
      %s114 = sphi 0, %s113
      %s130 = sphi 0, %s114
      %s138 = sphi 0, %s140
      %s141 = sphi 0, %s138
      %s142 = sphi 0, %s141
      %s158 = sphi 0, %s142
    $region4: #{aspect_pallas.1} parent=1 // loop_header_branch
      %21 = sbr.rel (%p19) target = $region8
    $region5: #{aspect_pallas.1} parent=1 // loop_body
      %s23 = ssub.s32 %s18, 1
      %s24 = ssub.s32 %s18, 2
      %s31 = sadd.s32 1, %s26
      %p32 = scmp.ge.s32.totalorder %s31, 2
      %s33 = scalar_select %p32, 0, %s31
      %s34 = sadd.s32 1, %s25
      %s35 = scalar_select %p32, %s34, %s25
      %p36 = scmp.ge.s32.totalorder %s35, 2
      %s37 = scalar_select %p36, 0, %s35
      %s38 = ssub.s32 %s25, %s37
      %s39 = ssub.s32 %s26, %s33
      %s40 = sor.u32 %s38, %s39
      %p41 = scmp.eq.s32.totalorder %s40, 0
      %s43 = sadd.s32 %s42, 1
      %s44 = scalar_select %p41, %s42, %s43
      %p47 = pneg %p41
      %p48 = scmp.eq.s32.totalorder %s18, 3
      %p49 = por %p47, %p48
      %p50 = scmp.ne.s32.totalorder %s42, %s45
      %p51 = scmp.eq.s32.totalorder %s18, 0
      %p52 = por %p50, %p51
      %p53 = scmp.ne.s32.totalorder %s42, %s45
      %p54 = scmp.eq.s32.totalorder %s23, 3
      %p55 = por %p53, %p54
      %p56 = scmp.ne.s32.totalorder %s45, %s46
      %p57 = scmp.eq.s32.totalorder %s23, 0
      %p58 = por %p56, %p57
      %p59 = scmp.ne.s32.totalorder %s45, %s46
      %p60 = scmp.eq.s32.totalorder %s24, 3
      %p61 = por %p59, %p60
      %p63 = scmp.ne.s32.totalorder %s46, %s62
      %p64 = scmp.eq.s32.totalorder %s24, 0
      %p65 = por %p63, %p64
      %s66 = ssub.s32 %s26, 1
      %p67 = scmp.gt.s32.totalorder %s66, 0
      %s68 = scalar_select %p67, %s66, 0
      %s69 = ssub.s32 %s33, 1
      %p70 = scmp.gt.s32.totalorder %s69, 0
      %s71 = scalar_select %p70, %s69, 0
      %s72 = ssub.s32 %s25, %s37
      %s73 = ssub.s32 %s68, %s71
      %s74 = sor.u32 %s72, %s73
      %p75 = scmp.eq.s32.totalorder %s74, 0
      %s77 = sadd.s32 %s76, 1
      %s78 = scalar_select %p75, %s76, %s77
      %p81 = pneg %p75
      %p82 = scmp.eq.s32.totalorder %s18, 3
      %p83 = por %p81, %p82
      %p84 = scmp.ne.s32.totalorder %s76, %s79
      %p85 = scmp.eq.s32.totalorder %s18, 0
      %p86 = por %p84, %p85
      %p87 = scmp.ne.s32.totalorder %s76, %s79
      %p88 = scmp.eq.s32.totalorder %s23, 3
      %p89 = por %p87, %p88
      %p90 = scmp.ne.s32.totalorder %s79, %s80
      %p91 = scmp.eq.s32.totalorder %s23, 0
      %p92 = por %p90, %p91
      %p93 = scmp.ne.s32.totalorder %s79, %s80
      %p94 = scmp.eq.s32.totalorder %s24, 3
      %p95 = por %p93, %p94
      %p97 = scmp.ne.s32.totalorder %s80, %s96
      %p98 = scmp.eq.s32.totalorder %s24, 0
      %p99 = por %p97, %p98
      %s100 = sadd.s32 %s26, 1
      %p101 = scmp.lt.s32.totalorder %s100, 1
      %s102 = scalar_select %p101, %s100, 1
      %s103 = sadd.s32 %s33, 1
      %p104 = scmp.lt.s32.totalorder %s103, 1
      %s105 = scalar_select %p104, %s103, 1
      %s106 = ssub.s32 %s25, %s37
      %s107 = ssub.s32 %s102, %s105
      %s108 = sor.u32 %s106, %s107
      %p109 = scmp.eq.s32.totalorder %s108, 0
      %s111 = sadd.s32 %s110, 1
      %s112 = scalar_select %p109, %s110, %s111
      %p115 = pneg %p109
      %p116 = scmp.eq.s32.totalorder %s18, 3
      %p117 = por %p115, %p116
      %p118 = scmp.ne.s32.totalorder %s110, %s113
      %p119 = scmp.eq.s32.totalorder %s18, 0
      %p120 = por %p118, %p119
      %p121 = scmp.ne.s32.totalorder %s110, %s113
      %p122 = scmp.eq.s32.totalorder %s23, 3
      %p123 = por %p121, %p122
      %p124 = scmp.ne.s32.totalorder %s113, %s114
      %p125 = scmp.eq.s32.totalorder %s23, 0
      %p126 = por %p124, %p125
      %p127 = scmp.ne.s32.totalorder %s113, %s114
      %p128 = scmp.eq.s32.totalorder %s24, 3
      %p129 = por %p127, %p128
      %p131 = scmp.ne.s32.totalorder %s114, %s130
      %p132 = scmp.eq.s32.totalorder %s24, 0
      %p133 = por %p131, %p132
      %s134 = ssub.s32 %s25, %s37
      %s135 = ssub.s32 %s26, %s33
      %s136 = sor.u32 %s134, %s135
      %p137 = scmp.eq.s32.totalorder %s136, 0
      %s139 = sadd.s32 %s138, 1
      %s140 = scalar_select %p137, %s138, %s139
      %p143 = pneg %p137
      %p144 = scmp.eq.s32.totalorder %s18, 3
      %p145 = por %p143, %p144
      %p146 = scmp.ne.s32.totalorder %s138, %s141
      %p147 = scmp.eq.s32.totalorder %s18, 0
      %p148 = por %p146, %p147
      %p149 = scmp.ne.s32.totalorder %s138, %s141
      %p150 = scmp.eq.s32.totalorder %s23, 3
      %p151 = por %p149, %p150
      %p152 = scmp.ne.s32.totalorder %s141, %s142
      %p153 = scmp.eq.s32.totalorder %s23, 0
      %p154 = por %p152, %p153
      %p155 = scmp.ne.s32.totalorder %s141, %s142
      %p156 = scmp.eq.s32.totalorder %s24, 3
      %p157 = por %p155, %p156
      %p159 = scmp.ne.s32.totalorder %s142, %s158
      %p160 = scmp.eq.s32.totalorder %s24, 0
      %p161 = por %p159, %p160
      %p162 = scmp.le.s32.totalorder 1, %s18
      %p163 = scmp.lt.s32.totalorder %s18, 5
      %p164 = pnand %p162, %p163
      %p165 = pneg %p164
      // Predicated region
      $region9: #{aspect_pallas.1} parent=5 // pred_check
        _
      $region10: #{aspect_pallas.1} parent=5 // pred_check_branch
        %167 = sbr.rel (%p164) target = $region12
      $region11: #{aspect_pallas.1} parent=5 // pred_region
        %s168 = ssub.s32 %s18, 1
      $region12: #{aspect_pallas.1} parent=5 // pred_fallthru
        _
      %p169 = scmp.lt.s32.totalorder %s18, 4
      // Predicated region
      $region13: #{aspect_pallas.1} parent=5 // pred_check
        %p170 = pneg %p169
      $region14: #{aspect_pallas.1} parent=5 // pred_check_branch
        %172 = sbr.rel (%p170) target = $region16
      $region15: #{aspect_pallas.1} parent=5 // pred_region
        // Predicated region
        $region17: #{aspect_pallas.1} parent=15 // pred_check
          %p173 = pneg %p52
        $region18: #{aspect_pallas.1} parent=15 // pred_check_branch
          %175 = sbr.rel (%p173) target = $region20
        $region19: #{aspect_pallas.1} parent=15 // pred_region
          %s176 = sand.u32 %s42, 1
          %s177 = scalar_lea.sflag [#allocation3], %s176
          %s178 = sand.u32 %s42, 1
          %s179 = smul.addr %s178, 8
          %s180 = scalar_lea.vmem [#allocation2], %s179
          %s182 = ssub.s32 128, 128
          %183 = vsyncadd %s177, %s182
          %s184 = smul.addr %s25, 2
          %s185 = sadd.s32 %s26, %s184
          %s186 = smul.addr %s185, 128
          %s187 = scalar_lea.hbm %s0, %s186
          %s189 = sshll.u32 %s180, 4
          %s190 = int_to_ptr.vmem [resolvable:$true] %s189
          %192 = dma.hbm_to_vmem [thread:$0]  %s187, 128, %s190, %s177
        $region20: #{aspect_pallas.1} parent=15 // pred_fallthru
          _
        // Predicated region
        $region21: #{aspect_pallas.1} parent=15 // pred_check
          %p193 = pneg %p86
        $region22: #{aspect_pallas.1} parent=15 // pred_check_branch
          %195 = sbr.rel (%p193) target = $region24
        $region23: #{aspect_pallas.1} parent=15 // pred_region
          %s196 = sand.u32 %s18, 1
          %s197 = scalar_lea.sflag [#allocation6], %s196
          %s198 = sand.u32 %s76, 1
          %s199 = smul.addr %s198, 8
          %s200 = scalar_lea.vmem [#allocation5], %s199
          %s201 = ssub.s32 %s26, 1
          %p202 = scmp.gt.s32.totalorder %s201, 0
          %s203 = scalar_select %p202, %s201, 0
          %s205 = ssub.s32 128, 128
          %206 = vsyncadd %s197, %s205
          %s207 = smul.addr %s25, 2
          %s208 = sadd.s32 %s203, %s207
          %s209 = smul.addr %s208, 128
          %s210 = scalar_lea.hbm %s1, %s209
          %s212 = sshll.u32 %s200, 4
          %s213 = int_to_ptr.vmem [resolvable:$true] %s212
          %215 = dma.hbm_to_vmem [thread:$0]  %s210, 128, %s213, %s197
        $region24: #{aspect_pallas.1} parent=15 // pred_fallthru
          _
        // Predicated region
        $region25: #{aspect_pallas.1} parent=15 // pred_check
          %p216 = pneg %p120
        $region26: #{aspect_pallas.1} parent=15 // pred_check_branch
          %218 = sbr.rel (%p216) target = $region28
        $region27: #{aspect_pallas.1} parent=15 // pred_region
          %s219 = sand.u32 %s18, 1
          %s220 = scalar_lea.sflag [#allocation6], %s219
          %s221 = sand.u32 %s110, 1
          %s222 = smul.addr %s221, 8
          %s223 = scalar_lea.vmem [#allocation7], %s222
          %s224 = sadd.s32 %s26, 1
          %p225 = scmp.lt.s32.totalorder %s224, 1
          %s226 = scalar_select %p225, %s224, 1
          %s228 = ssub.s32 128, 128
          %229 = vsyncadd %s220, %s228
          %s230 = smul.addr %s25, 2
          %s231 = sadd.s32 %s226, %s230
          %s232 = smul.addr %s231, 128
          %s233 = scalar_lea.hbm %s2, %s232
          %s235 = sshll.u32 %s223, 4
          %s236 = int_to_ptr.vmem [resolvable:$true] %s235
          %238 = dma.hbm_to_vmem [thread:$0]  %s233, 128, %s236, %s220
        $region28: #{aspect_pallas.1} parent=15 // pred_fallthru
          _
      $region16: #{aspect_pallas.1} parent=5 // pred_fallthru
        _
      %p239 = scmp.le.s32.totalorder 1, %s18
      %p240 = scmp.lt.s32.totalorder %s18, 5
      %p241 = pnand %p239, %p240
      %p242 = pneg %p241
      // Predicated region
      $region29: #{aspect_pallas.1} parent=5 // pred_check
        _
      $region30: #{aspect_pallas.1} parent=5 // pred_check_branch
        %244 = sbr.rel (%p241) target = $region32
      $region31: #{aspect_pallas.1} parent=5 // pred_region
        %s245 = ssub.s32 %s18, 1
        %s246 = sand.u32 %s45, 1
        %s247 = scalar_lea.sflag [#allocation3], %s246
        %s248 = sand.u32 %s45, 1
        %s249 = smul.addr %s248, 8
        %s250 = scalar_lea.vmem [#allocation2], %s249
        // Predicated region
        $region33: #{aspect_pallas.1} parent=31 // pred_check
          %p251 = pneg %p58
        $region34: #{aspect_pallas.1} parent=31 // pred_check_branch
          %253 = sbr.rel (%p251) target = $region36
        $region35: #{aspect_pallas.1} parent=31 // pred_region
          %254 = dma.done %s247, 128
        $region36: #{aspect_pallas.1} parent=31 // pred_fallthru
          _
        %s255 = sand.u32 %s23, 1
        %s256 = scalar_lea.sflag [#allocation6], %s255
        %s257 = sand.u32 %s79, 1
        %s258 = smul.addr %s257, 8
        %s259 = scalar_lea.vmem [#allocation5], %s258
        // Predicated region
        $region37: #{aspect_pallas.1} parent=31 // pred_check
          %p260 = pneg %p92
        $region38: #{aspect_pallas.1} parent=31 // pred_check_branch
          %262 = sbr.rel (%p260) target = $region40
        $region39: #{aspect_pallas.1} parent=31 // pred_region
          %263 = dma.done %s256, 128
        $region40: #{aspect_pallas.1} parent=31 // pred_fallthru
          _
        %s264 = sand.u32 %s23, 1
        %s265 = scalar_lea.sflag [#allocation6], %s264
        %s266 = sand.u32 %s113, 1
        %s267 = smul.addr %s266, 8
        %s268 = scalar_lea.vmem [#allocation7], %s267
        // Predicated region
        $region41: #{aspect_pallas.1} parent=31 // pred_check
          %p269 = pneg %p126
        $region42: #{aspect_pallas.1} parent=31 // pred_check_branch
          %271 = sbr.rel (%p269) target = $region44
        $region43: #{aspect_pallas.1} parent=31 // pred_region
          %272 = dma.done %s265, 128
        $region44: #{aspect_pallas.1} parent=31 // pred_fallthru
          _
        %s273 = sand.u32 %s45, 1
        %s274 = scalar_lea.sflag [#allocation3], %s273
        %s275 = sand.u32 %s45, 1
        %s276 = smul.addr %s275, 8
        %s277 = scalar_lea.vmem [#allocation2], %s276
        %p278 = pneg %p58
        %p279 = pneg %p55
        %s280 = sand.u32 %s23, 1
        %s281 = scalar_lea.sflag [#allocation6], %s280
        %s282 = sand.u32 %s79, 1
        %s283 = smul.addr %s282, 8
        %s284 = scalar_lea.vmem [#allocation5], %s283
        %p285 = pneg %p92
        %p286 = pneg %p89
        %s287 = sand.u32 %s23, 1
        %s288 = scalar_lea.sflag [#allocation6], %s287
        %s289 = sand.u32 %s113, 1
        %s290 = smul.addr %s289, 8
        %s291 = scalar_lea.vmem [#allocation7], %s290
        %p292 = pneg %p126
        %p293 = pneg %p123
        %p294 = pneg %p154
        %p295 = pneg %p151
        %s296 = sand.u32 %s141, 1
        %s297 = scalar_lea.sflag [#allocation4], %s296
        %s298 = sand.u32 %s141, 1
        %s299 = smul.addr %s298, 8
        %s300 = scalar_lea.vmem [#allocation8], %s299
        %s301 = ssub.s32 %s28, 1
        %p302 = scmp.gt.s32.totalorder %s301, 0
        %s303 = scalar_select %p302, %s301, 0
        %s304 = sadd.s32 %s28, 1
        %p305 = scmp.lt.s32.totalorder %s304, 1
        %s306 = scalar_select %p305, %s304, 1
        %s307 = smul.u32 %s28, 8
        %v308 = vld [vmem:[%s250] sm:$0xff]
        %v309 = vld [vmem:[%s259 + $0x7] sm:$0x1]
        %v310 = vld [vmem:[%s268] sm:$0x1]
        %v312 = vrot.slane %v308, 7
        %vm314 = vcmask 1040384
        %v315 = vsel %vm314, %v309, %v312
        %v316 = vrot.slane %v308, 1
        %v319 = vrot.slane %v310, 1
        %vm321 = vcmask 1046528
        %v322 = vsel %vm321, %v316, %v319
        %v323 = vlaneseq
        %v324 = vshrl.u32 %v323, 7
        %v325 = vstv %s307
        %v326 = vadd.s32 %v325, %v324
        %vm327 = vcmp.eq.s32.totalorder %v326, 0
        %v328 = vsel %vm327, 1, 0
        %vm329 = vcmp.eq.s32.totalorder %v328, 1
        %v330 = vsel %vm329, 0.0, %v315
        %vm331 = vcmp.ge.s32.totalorder %v326, 15
        %v332 = vsel %vm331, 1, 0
        %vm333 = vcmp.eq.s32.totalorder %v332, 1
        %v334 = vsel %vm333, 0.0, %v322
        %v335 = vmul.f32 %v308, 2.0
        %v336 = vadd.f32 %v330, %v335
        %v337 = vadd.f32 %v336, %v334
        %v338 = vsub.f32 %v334, %v330
        %340 = vrot.lane.b32.xlu0 %v337, 1
        %v341 = vpop.permute.xlu0 %340
        %vm343 = vcmask 7168
        %v344 = vsel %vm343, 0.0, %v341
        %vm345 = vcmask 138240
        %v346 = vsel %vm345, %v344, 0.0
        %348 = vrot.lane.b32.xlu0 %v338, 1
        %v349 = vpop.permute.xlu0 %348
        %v351 = vsel %vm343, 0.0, %v349
        %v352 = vsel %vm345, %v351, 0.0
        %354 = vrot.lane.b32.xlu0 %v346, 2
        %v355 = vpop.permute.xlu0 %354
        %v357 = vsub.f32 %v346, %v355
        %v358 = vmul.f32 %v338, 2.0
        %v359 = vadd.f32 %v352, %v358
        %361 = vrot.lane.b32.xlu0 %v352, 126
        %v362 = vpop.permute.xlu0 %361
        %v364 = vadd.f32 %v359, %v362
        %v365 = vsub.f32 0.0, %v364
        %367 = vrot.lane.b32.xlu0 %v357, 126
        %v368 = vpop.permute.xlu0 %367
        %v370 = vand.u32 2147483647, %v368
        %v371 = vand.u32 2147483647, %v365
        %v372 = vmin.f32 %v370, %v371
        %v373 = vmax.f32 %v370, %v371
        %v374 = vrcp.pop %v373
        %v375 = vmul.f32 %v372, %v374
        %v376 = vmul.f32 %v375, %v375
        %v377 = vmul.f32 0.002785687, %v376
        %v378 = vadd.f32 %v377, -0.015866
        %v379 = vmul.f32 %v378, %v376
        %v380 = vadd.f32 %v379, 0.04247222
        %v381 = vmul.f32 %v380, %v376
        %v382 = vadd.f32 %v381, -0.074975304
        %v383 = vmul.f32 %v382, %v376
        %v384 = vadd.f32 %v383, 0.1064488
        %v385 = vmul.f32 %v384, %v376
        %v386 = vadd.f32 %v385, -0.14207031
        %v387 = vmul.f32 %v386, %v376
        %v388 = vadd.f32 %v387, 0.19993454
        %v389 = vmul.f32 %v388, %v376
        %v390 = vadd.f32 %v389, -0.33333147
        %v391 = vmul.f32 %v390, %v376
        %v392 = vmul.f32 %v391, %v375
        %v393 = vadd.f32 %v392, %v375
        %vm394 = vcmp.gt.f32.partialorder %v371, %v370
        %v395 = vsub.f32 1.5707964, %v393
        %v396 = vsel %vm394, %v395, %v393
        %vm397 = vcmp.lt.f32.partialorder %v368, 0.0
        %v398 = vsub.f32 3.1415927, %v396
        %v399 = vsel %vm397, %v398, %v396
        %vm400 = vcmp.lt.s32.totalorder %v368, 0
        %v401 = vsel %vm400, 3.1415927, 0.0
        %vm402 = vcmp.eq.f32.partialorder %v365, 0.0
        %v403 = vsel %vm402, %v401, %v399
        %vm404 = vcmp.ne.f32.partialorder %v368, %v368
        %vm405 = vcmp.ne.f32.partialorder %v365, %v365
        %vm406 = vmor %vm404, %vm405
        %v407 = vsel %vm406, nan, %v403
        %vm408 = vcmp.lt.f32.partialorder %v368, 0.0
        %v409 = vsel %vm408, 2.3561945, 0.7853982
        %vm410 = vcmp.eq.s32.totalorder %v370, inf
        %vm411 = vcmp.eq.s32.totalorder %v371, inf
        %vm412 = vmand %vm410, %vm411
        %v413 = vsel %vm412, %v409, %v407
        %v414 = vand.u32 2147483647, %v413
        %v415 = vand.u32 %v365, 2147483648
        %v416 = vor.u32 %v414, %v415
        %v417 = vmul.f32 %v416, 57.29578
        %vm418 = vcmp.gt.f32.partialorder %v417, 90.0
        %v419 = vsub.f32 450.0, %v417
        %v420 = vsub.f32 90.0, %v417
        %v421 = vsel %vm418, %v419, %v420
        %vm422 = vcmask 130048
        %423 = vst.msk [vmem:[%s300] sm:$0xff] %vm422, %v421
        %s424 = sand.u32 %s141, 1
        %s425 = scalar_lea.sflag [#allocation4], %s424
        %s426 = sand.u32 %s141, 1
        %s427 = smul.addr %s426, 8
        %s428 = scalar_lea.vmem [#allocation8], %s427
        // Predicated region
        $region45: #{aspect_pallas.1} parent=31 // pred_check
          %p429 = pneg %p151
        $region46: #{aspect_pallas.1} parent=31 // pred_check_branch
          %431 = sbr.rel (%p429) target = $region48
        $region47: #{aspect_pallas.1} parent=31 // pred_region
          %s433 = ssub.s32 128, 128
          %434 = vsyncadd %s425, %s433
          %s435 = smul.addr %s27, 2
          %s436 = sadd.s32 %s28, %s435
          %s437 = smul.addr %s436, 128
          %s438 = scalar_lea.hbm %s3, %s437
          %s440 = sshll.u32 %s428, 4
          %s441 = int_to_ptr.vmem [resolvable:$true] %s440
          %443 = dma.vmem_to_hbm [thread:$0]  %s441, 128, %s438, %s425
        $region48: #{aspect_pallas.1} parent=31 // pred_fallthru
          _
      $region32: #{aspect_pallas.1} parent=5 // pred_fallthru
        _
      %p444 = scmp.le.s32.totalorder 2, %s18
      // Predicated region
      $region49: #{aspect_pallas.1} parent=5 // pred_check
        %p445 = pneg %p444
      $region50: #{aspect_pallas.1} parent=5 // pred_check_branch
        %447 = sbr.rel (%p445) target = $region52
      $region51: #{aspect_pallas.1} parent=5 // pred_region
        %s448 = ssub.s32 %s18, 2
        // Predicated region
        $region53: #{aspect_pallas.1} parent=51 // pred_check
          %p449 = pneg %p157
        $region54: #{aspect_pallas.1} parent=51 // pred_check_branch
          %451 = sbr.rel (%p449) target = $region56
        $region55: #{aspect_pallas.1} parent=51 // pred_region
          %s452 = sand.u32 %s142, 1
          %s453 = scalar_lea.sflag [#allocation4], %s452
          %s454 = sand.u32 %s142, 1
          %s455 = smul.addr %s454, 8
          %s456 = scalar_lea.vmem [#allocation8], %s455
          %457 = dma.done %s453, 128
        $region56: #{aspect_pallas.1} parent=51 // pred_fallthru
          _
      $region52: #{aspect_pallas.1} parent=5 // pred_fallthru
        _
    $region6: #{aspect_pallas.1} parent=1 // loop_footer
      %s22 = sadd.s32 1, %s18
    $region7: #{aspect_pallas.1} parent=1 // loop_footer_branch
      %17 = sbr.rel target = $region3
    $region8: #{aspect_pallas.1} parent=1 // loop_exit
      _
    %458 = vsyncpa [#allocation3], 1
    %s459 = scalar_lea.sflag [#allocation3], 1
    %460 = vsyncpa %s459, 1
    %461 = vsyncpa [#allocation6], 1
    %s462 = scalar_lea.sflag [#allocation6], 1
    %463 = vsyncpa %s462, 1
    %464 = vsyncpa [#allocation4], 1
    %s465 = scalar_lea.sflag [#allocation4], 1
    %466 = vsyncpa %s465, 1

</llo_original>
